<compile_context>
chip_gen: v7x
topology: tpu7x:2x2x1
jax: 0.10.0
libtpu: 0.0.40
codegen_flags: <defaults>
</compile_context>

<pallas_src>
import numpy as np
import jax
import jax.numpy as jnp
from jax.experimental import pallas as pl
from jax.experimental.pallas import tpu as pltpu


def _round_up(x, m):
    return ((x + m - 1) // m) * m


def _cdiv(a, b):
    return (a + b - 1) // b


def _vmem_budget_bytes():
    """Generation-aware VMEM working-set budget (and raw capacity)."""
    cap = 64 << 20                                   # conservative default (v7x)
    try:
        info = pltpu.get_tpu_info()
        cap_attr = getattr(info, "vmem_capacity_bytes", None)
        if cap_attr:
            cap = int(cap_attr)
    except Exception:
        pass
    # ~60% of capacity: ~76 MiB on v5e/v6e (128 MiB), ~38 MiB on v7x (64 MiB).
    return max(24 << 20, int(cap * 0.6)), cap


# ---------------------------------------------------------------------------
# Pallas kernel: out tile = frames tile @ (window-folded MDCT cosine basis) tile
# ---------------------------------------------------------------------------
def _mdct_matmul_kernel(frames_ref, basis_ref, out_ref):
    # frames_ref: (TF, L)   basis_ref: (L, TN)   out_ref: (TF, TN)
    out_ref[...] = jnp.dot(frames_ref[...], basis_ref[...],
                           preferred_element_type=jnp.float32).astype(out_ref.dtype)


def _make_windowed_mdct_basis(window, n_bins_padded, dtype):
    """B[n, k] = window[n] * sqrt(2/N) * cos(pi/N * (n + 0.5 + N/2) * (k + 0.5)),
    zero-padded along k up to n_bins_padded (lane-dense output)."""
    L = int(window.shape[0])
    N = L // 2
    n = np.arange(L, dtype=np.float64)[:, None]
    k = np.arange(N, dtype=np.float64)[None, :]
    basis = np.sqrt(2.0 / N) * np.cos(np.pi / N * (n + 0.5 + N / 2.0) * (k + 0.5))
    basis = np.asarray(window, np.float64)[:, None] * basis          # fold window (exact)
    basis = np.pad(basis, ((0, 0), (0, n_bins_padded - N)))
    return jnp.asarray(basis).astype(dtype)


def _mdct_pallas(frames, basis, *, tile_frames, tile_n, out_dtype, vmem_limit_bytes):
    Fp, L = frames.shape
    _, NP = basis.shape
    n_i = Fp // tile_frames
    n_j = NP // tile_n
    ib = frames.dtype.itemsize
    bb = basis.dtype.itemsize
    ob = np.dtype(out_dtype).itemsize

    # Frames tile index is invariant over the inner (bin) axis -> DMA'd once per i.
    # Basis is re-streamed per frame tile only when it has to be split along bins.
    basis_reads = n_i if n_j > 1 else 1
    cost = pl.CostEstimate(
        flops=int(2 * Fp * L * NP),
        transcendentals=0,
        bytes_accessed=int(Fp * L * ib + basis_reads * L * NP * bb + Fp * NP * ob),
    )

    return pl.pallas_call(
        _mdct_matmul_kernel,
        out_shape=jax.ShapeDtypeStruct((Fp, NP), out_dtype),
        grid_spec=pltpu.PrefetchScalarGridSpec(
            num_scalar_prefetch=0,
            grid=(n_i, n_j),
            in_specs=[
                pl.BlockSpec((tile_frames, L), lambda i, j: (i, 0)),   # frames tile
                pl.BlockSpec((L, tile_n), lambda i, j: (0, j)),        # basis tile
            ],
            out_specs=pl.BlockSpec((tile_frames, tile_n), lambda i, j: (i, j)),
        ),
        compiler_params=pltpu.CompilerParams(
            dimension_semantics=("parallel", "parallel"),
            vmem_limit_bytes=int(vmem_limit_bytes)),
        cost_estimate=cost,
    )(frames, basis)


class MDCT:
    """JAX/Pallas equivalent of the PyTorch MDCT module (odd-stacked, mono)."""

    _TF_TARGET = 256            # MXU M-dimension rows per grid step

    def __init__(self, window_function, step_length=None, n_fft=2048, center=True,
                 compute_dtype=jnp.bfloat16, output_dtype=jnp.float32):
        window = np.asarray(window_function, dtype=np.float64)
        self.frame_length = int(window.shape[0])
        self.step_length = (int(step_length) if step_length is not None
                            else self.frame_length // 2)
        self.n_fft = n_fft      # API parity; frame_length governs, as in the reference
        self.center = center
        self.n_bins = self.frame_length // 2
        self.n_bins_padded = max(128, _round_up(self.n_bins, 128))   # lane-dense output
        self.compute_dtype = np.dtype(compute_dtype)                 # bf16 default (MXU-friendly)
        self.output_dtype = np.dtype(output_dtype)                   # f32 default
        self.basis = _make_windowed_mdct_basis(window, self.n_bins_padded,
                                               self.compute_dtype)   # (L, NP), window folded in
        self._vmem_budget, self._vmem_cap = _vmem_budget_bytes()

    # -- tiling / VMEM budgeting ---------------------------------------------
    def _choose_tiles(self, n_frames):
        L, NP = self.frame_length, self.n_bins_padded
        ib = self.compute_dtype.itemsize
        ob = self.output_dtype.itemsize
        pack = {1: 32, 2: 16, 4: 8}.get(ib, 8)        # sublane packing of compute dtype

        def working_set(tf_, tn_):
            return (2 * L * tn_ * ib      # basis tiles (default double-buffered pipeline)
                    + 2 * tf_ * L * ib    # frames tiles (double-buffered)
                    + 2 * tf_ * tn_ * ob)  # output tiles (double-buffered)

        # Frame tile: target 256 rows, but keep >= ~4 grid steps along the parallel
        # axis when n_frames allows (so both v7x TensorCores get pipelined work).
        tf_cap = max(pack, _round_up(_cdiv(n_frames, 4), pack))
        tf_target = max(pack, _round_up(min(self._TF_TARGET, tf_cap), pack))

        # Bin tile: largest divisor of NP (multiple of 128) such that everything fits.
        m = NP // 128
        tn_candidates = sorted({d * 128 for d in range(1, m + 1) if m % d == 0},
                               reverse=True)
        for tn in tn_candidates:
            tf = tf_target
            while tf > pack and working_set(tf, tn) > self._vmem_budget:
                tf = max(pack, (tf // 2) // pack * pack)
            if working_set(tf, tn) <= self._vmem_budget:
                return tf, tn, working_set(tf, tn)
        tf, tn = pack, 128
        return tf, tn, working_set(tf, tn)

    # -- forward ----------------------------------------------------------------
    def __call__(self, x):
        L, hop = self.frame_length, self.step_length
        N = self.n_bins
        x = jnp.asarray(x, jnp.float32)
        assert x.ndim == 1, "mono 1-D signal expected (samples,)"
        # TODO(synk): multi-channel (samples x channels) path of the reference not implemented.

        # ---- framing bookkeeping (torch.stft / librosa floor tail policy) ------
        pad_front = L // 2 if self.center else 0
        pad_back_center = L // 2 if self.center else 0
        n_eff = int(x.shape[0]) + pad_front + pad_back_center
        n_eff = max(n_eff, L)
        n_frames = (n_eff - L) // hop + 1

        tf, tn, needed_bytes = self._choose_tiles(n_frames)
        Fp = _round_up(n_frames, tf)

        # Single signal pad covers: center padding, short-signal padding, and the
        # tail needed so Fp (tile-rounded) frames can be sliced out directly.
        total_len = (Fp - 1) * hop + L
        pad_back = max(0, total_len - (int(x.shape[0]) + pad_front))
        xp = jnp.pad(x, (pad_front, pad_back)).astype(self.compute_dtype)

        # ---- glue (XLA): overlapped framing, no index-array gather when possible
        if L % hop == 0:
            r = L // hop
            segs = [xp[s * hop: s * hop + Fp * hop].reshape(Fp, hop) for s in range(r)]
            frames = segs[0] if r == 1 else jnp.concatenate(segs, axis=-1)   # (Fp, L)
        else:
            # TODO(synk): hop not dividing frame_length keeps an XLA gather for framing.
            idx = jnp.arange(Fp)[:, None] * hop + jnp.arange(L)[None, :]
            frames = xp[idx]                                                  # (Fp, L)

        vmem_limit = min(max(needed_bytes + (4 << 20), 32 << 20),
                         max(self._vmem_cap - (8 << 20), 32 << 20))

        # ---- hot path: Pallas kernel (pure MXU matmul, window folded into basis)
        out = _mdct_pallas(frames, self.basis, tile_frames=tf, tile_n=tn,
                           out_dtype=self.output_dtype,
                           vmem_limit_bytes=vmem_limit)

        return out[:n_frames, :N]                                     # (num_frames, N)


# ---------------------------------------------------------------------------
# Pure-JAX reference (replicates the torch cmdct/_mdct FFT path) for checking
# ---------------------------------------------------------------------------
def _mdct_ref_frames(frames_windowed):
    L = frames_windowed.shape[-1]
    N = L // 2
    n0 = (N + 1) / 2.0
    pre = jnp.exp(-1j * jnp.pi * jnp.arange(L) / L)
    post = jnp.exp(-1j * jnp.pi * n0 * (jnp.arange(N) + 0.5) / N)
    X = jnp.fft.fft(frames_windowed.astype(jnp.complex64) * pre, axis=-1)[..., :N]
    return (jnp.real(X * post) * np.sqrt(1.0 / N) * np.sqrt(2.0)).astype(jnp.float32)


if __name__ == "__main__":
    key = jax.random.PRNGKey(0)
    k1, k2, k3 = jax.random.split(key, 3)

    def check(frame_length, n_samples, seed_key, step_length=None,
              compute_dtype=jnp.bfloat16, tol=5e-2):
        n = np.arange(frame_length)
        window = np.sin(np.pi * (n + 0.5) / frame_length).astype(np.float32)
        hop = int(step_length) if step_length is not None else frame_length // 2
        x = jax.random.normal(seed_key, (n_samples,), dtype=jnp.float32)

        mdct = MDCT(window_function=window, step_length=step_length, n_fft=2048,
                    center=True, compute_dtype=compute_dtype)
        y = jax.block_until_ready(mdct(x))

        # FFT-based reference with the same (torch.stft-style, floor) framing
        xp = jnp.pad(x, (frame_length // 2, frame_length // 2))
        n_frames = (xp.shape[0] - frame_length) // hop + 1
        idx = jnp.arange(n_frames)[:, None] * hop + jnp.arange(frame_length)[None, :]
        ref = _mdct_ref_frames(xp[idx] * window[None, :])

        assert y.shape == (n_frames, frame_length // 2), (y.shape, ref.shape)
        np.testing.assert_allclose(np.asarray(y, np.float32), np.asarray(ref),
                                   rtol=tol, atol=tol)

    # bf16 default compute path (hop = L//2 -> reshape/concat framing, no gather)
    check(frame_length=64, n_samples=256, seed_key=k1, tol=5e-2)
    # f32 opt-in path for strict parity with the FFT reference
    check(frame_length=128, n_samples=500, seed_key=k2,
          compute_dtype=jnp.float32, tol=2e-3)
    # hop that does not divide frame_length -> gather-fallback framing
    check(frame_length=128, n_samples=700, seed_key=k3, step_length=48, tol=5e-2)

    print("KERNEL_OK")
</pallas_src>

<mosaic_0001>
module attributes {stable_mosaic.version = 11 : i64} {
  func.func @_mdct_matmul_kernel(%arg0: i32, %arg1: i32, %arg2: memref<16x64xbf16, #tpu.memory_space<vmem>>, %arg3: memref<64x128xbf16, #tpu.memory_space<vmem>>, %arg4: memref<16x128xf32, #tpu.memory_space<vmem>>) attributes {dimension_semantics = [#tpu.dimension_semantics<parallel>, #tpu.dimension_semantics<parallel>], iteration_bounds = array<i64: 1, 1>, scalar_prefetch = 0 : i64, scratch_operands = 0 : i64, tpu.core_type = #tpu.core_type<tc>, window_params = [{transform_indices = @transform_0, window_bounds = array<i64: 16, 64>}, {transform_indices = @transform_1, window_bounds = array<i64: 64, 128>}, {transform_indices = @transform_2, window_bounds = array<i64: 16, 128>}]} {
    %c0 = arith.constant 0 : index
    %c0_0 = arith.constant 0 : index
    %0 = vector.load %arg2[%c0, %c0_0] : memref<16x64xbf16, #tpu.memory_space<vmem>>, vector<16x64xbf16>
    %c0_1 = arith.constant 0 : index
    %c0_2 = arith.constant 0 : index
    %1 = vector.load %arg3[%c0_1, %c0_2] : memref<64x128xbf16, #tpu.memory_space<vmem>>, vector<64x128xbf16>
    %cst = arith.constant dense<0.000000e+00> : vector<16x128xf32>
    %2 = tpu.matmul %0, %1, %cst {dimension_numbers = #tpu.dot_dimension_numbers<[1], [0], [0], [1], [0, 0, 1, 1], [], []>} : vector<16x64xbf16>, vector<64x128xbf16>, vector<16x128xf32> -> vector<16x128xf32>
    %c0_3 = arith.constant 0 : index
    %c0_4 = arith.constant 0 : index
    %3 = vector.load %arg4[%c0_3, %c0_4] : memref<16x128xf32, #tpu.memory_space<vmem>>, vector<16x128xf32>
    tpu.vector_store %arg4[%c0_3, %c0_4], %2 {strides = array<i32>} : memref<16x128xf32, #tpu.memory_space<vmem>>, vector<16x128xf32>,
    return
  }
  func.func @transform_0(%arg0: i32, %arg1: i32) -> (i32, i32) {
    %c0_i32 = arith.constant 0 : i32
    %c0_i32_0 = arith.constant 0 : i32
    return %arg0, %c0_i32 : i32, i32
  }
  func.func @transform_1(%arg0: i32, %arg1: i32) -> (i32, i32) {
    %c0_i32 = arith.constant 0 : i32
    %c0_i32_0 = arith.constant 0 : i32
    return %c0_i32, %arg1 : i32, i32
  }
  func.func @transform_2(%arg0: i32, %arg1: i32) -> (i32, i32) {
    %c0_i32 = arith.constant 0 : i32
    return %arg0, %arg1 : i32, i32
  }
}

</mosaic_0001>

<llo_original>
// kernel: tpu_custom_call.1
$region0: #{tpu_custom_call.1}
  #allocation0 [shape = 'u32[]', space=smem, size = 0x4, offset = 0x4, fixed_abs, tag = 'smem constant byte address 0x4 - core index']
  #allocation1 [shape = 'u32[144,128]{1,0:T(1,128)}', space=vmem, size = 0x12000, scoped, tag = 'internal scratch']
  %s0 = inlined_call_operand.hbm [shape: bf16[16,64], index: 0, kind: input, shape index: {}]
  %s1 = inlined_call_operand.hbm [shape: bf16[64,128], index: 1, kind: input, shape index: {}]
  %s2 = inlined_call_operand.hbm [shape: f32[16,128], index: 2, kind: output, shape index: {}]
  %s3 = sld [smem:[#allocation0]]
  $region26: #{tpu_custom_call.1} parent=0
    _
  %s5 = ssub.s32 1, %s3
  %s6 = scalar_select 0, %s5, %s3
  $region1: #{tpu_custom_call.1} parent=0
    #allocation2 [shape = 'u8[4096]{0}', space=vmem, size = 0x1000, scoped, tag = 'input window, operand 0, single buffered']
    #allocation3 [shape = 's32[1]{0}', space=sflag, size = 0x4, scoped, tag = 'scoped memory for tpu_custom_call.1']
    #allocation4 [shape = 's32[1]{0}', space=sflag, size = 0x4, scoped, tag = 'scoped memory for tpu_custom_call.1']
    #allocation5 [shape = 'u8[16384]{0}', space=vmem, size = 0x4000, scoped, tag = 'input window, operand 1, single buffered']
    #allocation6 [shape = 's32[1]{0}', space=sflag, size = 0x4, scoped, tag = 'scoped memory for tpu_custom_call.1']
    #allocation7 [shape = 'u8[8192]{0}', space=vmem, size = 0x2000, scoped, tag = 'output window, operand 0, single buffered']
    %7 = vsyncpa [#allocation3], 0
    %8 = vsyncpa [#allocation6], 0
    %9 = vsyncpa [#allocation4], 0
    // Predicated region
    $region2: #{tpu_custom_call.1} parent=1 // pred_check
      _
    $region3: #{tpu_custom_call.1} parent=1 // pred_check_branch
      %11 = sbr.rel (0) target = $region5
    $region4: #{tpu_custom_call.1} parent=1 // pred_region
      %s13 = ssub.s32 128, 128
      %14 = vsyncadd [#allocation3], %s13
      %s15 = sshll.u32 [#allocation2], 4
      %s16 = int_to_ptr.vmem [resolvable:$true] %s15
      %21 = dma.hbm_to_vmem [thread:$0]  %s0, 128, %s16, [#allocation3], 64, 64, 4
    $region5: #{tpu_custom_call.1} parent=1 // pred_fallthru
      _
    // Predicated region
    $region6: #{tpu_custom_call.1} parent=1 // pred_check
      _
    $region7: #{tpu_custom_call.1} parent=1 // pred_check_branch
      %23 = sbr.rel (0) target = $region9
    $region8: #{tpu_custom_call.1} parent=1 // pred_region
      %s25 = ssub.s32 512, 512
      %26 = vsyncadd [#allocation6], %s25
      %s27 = sshll.u32 [#allocation5], 4
      %s28 = int_to_ptr.vmem [resolvable:$true] %s27
      %33 = dma.hbm_to_vmem [thread:$0]  %s1, 512, %s28, [#allocation6], 64, 64, 4
    $region9: #{tpu_custom_call.1} parent=1 // pred_fallthru
      _
    // Predicated region
    $region10: #{tpu_custom_call.1} parent=1 // pred_check
      _
    $region11: #{tpu_custom_call.1} parent=1 // pred_check_branch
      %35 = sbr.rel (0) target = $region13
    $region12: #{tpu_custom_call.1} parent=1 // pred_region
      %36 = dma.done [#allocation3], 128
    $region13: #{tpu_custom_call.1} parent=1 // pred_fallthru
      _
    // Predicated region
    $region14: #{tpu_custom_call.1} parent=1 // pred_check
      _
    $region15: #{tpu_custom_call.1} parent=1 // pred_check_branch
      %38 = sbr.rel (0) target = $region17
    $region16: #{tpu_custom_call.1} parent=1 // pred_region
      %39 = dma.done [#allocation6], 512
    $region17: #{tpu_custom_call.1} parent=1 // pred_fallthru
      _
    %v41 = vld [vmem:[#allocation2] sm:$0xf]
    %v42 = vld [vmem:[#allocation2 + $0x4] sm:$0xf]
    %v43 = vld [vmem:[#allocation5] sm:$0xf]
    %v44 = vld [vmem:[#allocation5 + $0x4] sm:$0xf]
    %v45 = vld [vmem:[#allocation5 + $0x8] sm:$0xf]
    %v46 = vld [vmem:[#allocation5 + $0xc] sm:$0xf]
    %v47 = vld [vmem:[#allocation5 + $0x10] sm:$0xf]
    %v48 = vld [vmem:[#allocation5 + $0x14] sm:$0xf]
    %v49 = vld [vmem:[#allocation5 + $0x18] sm:$0xf]
    %v50 = vld [vmem:[#allocation5 + $0x1c] sm:$0xf]
    %v53 = vunpack.c.l.b16 %v41
    %v54 = vunpack.c.l.b16 %v42
    %v55 = vpack.c.b16 %v54, %v53
    %v64 = vunpack.c.l.b16 %v43
    %v65 = vunpack.c.l.b16 %v44
    %v66 = vunpack.c.l.b16 %v45
    %v67 = vunpack.c.l.b16 %v46
    %v68 = vunpack.c.l.b16 %v47
    %v69 = vunpack.c.l.b16 %v48
    %v70 = vunpack.c.l.b16 %v49
    %v71 = vunpack.c.l.b16 %v50
    %v72 = vpack.c.b16 %v65, %v64
    %v73 = vpack.c.b16 %v67, %v66
    %v74 = vpack.c.b16 %v69, %v68
    %v75 = vpack.c.b16 %v71, %v70
    %vm80 = vcmask 523264
    %v82 = vsel %vm80, %v55, 0
    %84 = vmatprep.subr.bf16.mxu0 0
    %85 = vmatpush1.bf16.msra.mxu0 %v72
    %86 = vmatprep.subr.bf16.mxu0 0
    %87 = vmatpush1.bf16.msra.mxu0 %v73
    %88 = vmatprep.subr.bf16.mxu0 0
    %89 = vmatpush1.bf16.msra.mxu0 %v74
    %90 = vmatprep.subr.bf16.mxu0 0
    %91 = vmatpush1.bf16.msra.mxu0 %v75
    %92 = vmatprep.subr.bf16.mxu0 0
    %93 = vmatpush1.bf16.msra.mxu0 0
    %94 = vmatprep.subr.bf16.mxu0 0
    %95 = vmatpush1.bf16.msra.mxu0 0
    %96 = vmatprep.subr.bf16.mxu0 0
    %97 = vmatpush1.bf16.msra.mxu0 0
    %98 = vmatprep.subr.bf16.mxu0 0
    %99 = vmatpush1.bf16.msra.mxu0 0
    %100 = vmatprep.subr.bf16.mxu0 0
    %101 = vmatpush1.bf16.msra.mxu0 0
    %102 = vmatprep.subr.bf16.mxu0 0
    %103 = vmatpush1.bf16.msra.mxu0 0
    %104 = vmatprep.subr.bf16.mxu0 0
    %105 = vmatpush1.bf16.msra.mxu0 0
    %106 = vmatprep.subr.bf16.mxu0 0
    %107 = vmatpush1.bf16.msra.mxu0 0
    %108 = vmatprep.subr.bf16.mxu0 0
    %109 = vmatpush1.bf16.msra.mxu0 0
    %110 = vmatprep.subr.bf16.mxu0 0
    %111 = vmatpush1.bf16.msra.mxu0 0
    %112 = vmatprep.subr.bf16.mxu0 0
    %113 = vmatpush1.bf16.msra.mxu0 0
    %114 = vmatprep.subr.bf16.mxu0 0
    %115 = vmatpush1.bf16.msra.mxu0 0
    %116 = vmatprep.mubr.bf16.mxu0 0
    %117 = vmatmul.mubr.bf16.gmra.mrb[0].mxu0 %v82
    %v118 = vpop.f32.mrb[0].mxu0
    %v119 = vadd.f32 0.0, %v118
    %v120 = vpop.f32.mrb[0].mxu0
    %v121 = vpop.f32.mrb[0].mxu0
    %v122 = vadd.f32 0.0, %v121
    %v123 = vpop.f32.mrb[0].mxu0
    %124 = vdwg.mxu0
    %125 = vst [vmem:[#allocation7] sm:$0xff] %v119
    %126 = vst [vmem:[#allocation7 + $0x8] sm:$0xff] %v122
    // Predicated region
    $region18: #{tpu_custom_call.1} parent=1 // pred_check
      _
    $region19: #{tpu_custom_call.1} parent=1 // pred_check_branch
      %128 = sbr.rel (0) target = $region21
    $region20: #{tpu_custom_call.1} parent=1 // pred_region
      %s130 = ssub.s32 256, 256
      %131 = vsyncadd [#allocation4], %s130
      %s132 = sshll.u32 [#allocation7], 4
      %s133 = int_to_ptr.vmem [resolvable:$true] %s132
      %138 = dma.vmem_to_hbm [thread:$0]  %s133, 256, %s2, [#allocation4], 128, 128, 8
    $region21: #{tpu_custom_call.1} parent=1 // pred_fallthru
      _
    // Predicated region
    $region22: #{tpu_custom_call.1} parent=1 // pred_check
      _
    $region23: #{tpu_custom_call.1} parent=1 // pred_check_branch
      %140 = sbr.rel (0) target = $region25
    $region24: #{tpu_custom_call.1} parent=1 // pred_region
      %141 = dma.done [#allocation4], 256
    $region25: #{tpu_custom_call.1} parent=1 // pred_fallthru
      _
    %142 = vsyncpa [#allocation3], 1
    %143 = vsyncpa [#allocation6], 1
    %144 = vsyncpa [#allocation4], 1

</llo_original>
